<compile_context>
chip_gen: v5e
topology: v5e:2x2
jax: 0.10.0
libtpu: 0.0.40
codegen_flags: <defaults>
</compile_context>

<pallas_src>
import math
from functools import partial

import jax
import jax.numpy as jnp
from jax import lax
from jax.experimental import pallas as pl
from jax.experimental.pallas import tpu as pltpu


def _round_up(v, m):
    return ((v + m - 1) // m) * m


# ----------------------------------------------------------------------------
# Pallas kernel: 3x3 conv (stride 1, pad 1, groups=1) + bias + ReLU
# 9-tap accumulation of small MXU dots over a flat, margin-padded image.
# ----------------------------------------------------------------------------
def _make_conv3x3_relu_kernel(H, W, Cin, Cout, lpad, le, comp_dtype):
    M = H * W

    def kernel(x_ref, w_ref, b_ref, o_ref, xe_ref):
        # x_ref : (1, Cin, M)     flat NCHW input (lane-dense spatial)
        # w_ref : (9, Cout, Cin)  weights per tap k = dy*3 + dx
        # b_ref : (Cout, 1)       bias (f32)
        # o_ref : (1, Cout, M)    flat output (no garbage columns)
        # xe_ref: (Cin, le)       scratch: [zero lpad | x | zero rpad]

        # Zero only the margins every step (small, lane-aligned, unmasked
        # stores).  Done unconditionally so a megacore grid split stays
        # correct; the data region is fully overwritten below.
        xe_ref[:, :lpad] = jnp.zeros((Cin, lpad), comp_dtype)
        xe_ref[:, lpad + M:] = jnp.zeros((Cin, le - lpad - M), comp_dtype)

        # Single lane-aligned copy of the whole input block (replaces the H
        # masked per-row halo stores of the previous version).
        xe_ref[:, lpad:lpad + M] = x_ref[0]

        # Column-boundary masks (replace explicit zero padding along W).
        col = lax.broadcasted_iota(jnp.int32, (Cin, M), 1) % W
        left_ok = col != 0           # tap dx=0 reads column w-1 -> invalid at w==0
        right_ok = col != (W - 1)    # tap dx=2 reads column w+1 -> invalid at w==W-1

        # 9-tap accumulation: each tap is a static lane shift of the flat
        # margin-padded image; one small MXU dot per tap, f32 accumulate.
        acc = jnp.zeros((Cout, M), jnp.float32)
        for dy in range(3):
            for dx in range(3):
                k = dy * 3 + dx
                off = lpad + (dy - 1) * W + (dx - 1)
                tap = xe_ref[:, off:off + M]
                if dx == 0:
                    tap = jnp.where(left_ok, tap, 0.0)
                elif dx == 2:
                    tap = jnp.where(right_ok, tap, 0.0)
                acc = acc + lax.dot_general(
                    w_ref[k], tap,
                    dimension_numbers=(((1,), (0,)), ((), ())),
                    preferred_element_type=jnp.float32)

        acc = acc + b_ref[...]                       # (Cout, 1) broadcast
        o_ref[...] = jnp.maximum(acc, 0.0).astype(o_ref.dtype)[None]

    return kernel


def conv3x3_relu(x_nchw, w_oihw, b):
    """3x3 conv, stride 1, pad 1, groups=1, + ReLU.  NCHW in, NCHW out."""
    N, Cin, H, W = x_nchw.shape
    Cout = w_oihw.shape[0]
    M = H * W
    comp_dtype = x_nchw.dtype
    lpad = _round_up(W + 1, 128)                     # aligned left margin >= W+1
    rpad = _round_up(W + 1, 128)                     # aligned right margin >= W+1
    le = lpad + M + rpad

    x_flat = x_nchw.reshape(N, Cin, M)               # free, contiguous
    # w3[dy*3+dx, co, ci] = w[co, ci, dy, dx]; operands in the compute dtype
    # (bf16-ready), accumulation stays f32 via preferred_element_type.
    w3 = jnp.transpose(w_oihw, (2, 3, 0, 1)).reshape(9, Cout, Cin).astype(comp_dtype)
    b2 = b.reshape(Cout, 1).astype(jnp.float32)

    kernel = _make_conv3x3_relu_kernel(H, W, Cin, Cout, lpad, le, comp_dtype)

    itemsize = jnp.dtype(comp_dtype).itemsize
    cost = pl.CostEstimate(
        flops=int(2 * N * Cout * Cin * 9 * H * W),
        transcendentals=0,
        bytes_accessed=int(N * Cin * M * itemsize      # activations in
                           + 9 * Cout * Cin * itemsize  # weights
                           + Cout * 4                   # bias
                           + N * Cout * M * itemsize))  # activations out

    out = pl.pallas_call(
        kernel,
        out_shape=jax.ShapeDtypeStruct((N, Cout, M), comp_dtype),
        grid_spec=pltpu.PrefetchScalarGridSpec(
            num_scalar_prefetch=0,
            grid=(N,),
            in_specs=[
                pl.BlockSpec((1, Cin, M), lambda n: (n, 0, 0)),
                pl.BlockSpec((9, Cout, Cin), lambda n: (0, 0, 0)),
                pl.BlockSpec((Cout, 1), lambda n: (0, 0)),
            ],
            out_specs=pl.BlockSpec((1, Cout, M), lambda n: (n, 0, 0)),
            scratch_shapes=[pltpu.VMEM((Cin, le), comp_dtype)],
        ),
        compiler_params=pltpu.CompilerParams(
            dimension_semantics=("parallel",)),
        cost_estimate=cost,
    )(x_flat, w3, b2)

    # Pure metadata reshape (no slice needed: output has no garbage columns).
    return out.reshape(N, Cout, H, W)


# ----------------------------------------------------------------------------
# Glue: PixelShuffle (pure layout), matches torch.nn.PixelShuffle semantics
# ----------------------------------------------------------------------------
def pixel_shuffle_nchw(y, r):
    # out[n, c, h*r+i, w*r+j] == y[n, c*r*r + i*r + j, h, w]
    N, C, H, W = y.shape
    Co = C // (r * r)
    y = y.reshape(N, Co, r, r, H, W)
    y = jnp.transpose(y, (0, 1, 4, 2, 5, 3))          # (N, Co, H, r, W, r)
    return y.reshape(N, Co, H * r, W * r)


# ----------------------------------------------------------------------------
# Module forward (matches _my_UpsampleBlock.forward), NCHW end-to-end
# ----------------------------------------------------------------------------
def init_params(key, filters, last_filters, scale):
    """Deterministic synthetic weights; OIHW (PyTorch) layout, per-stage."""
    params = []
    if scale in (2, 4, 8):
        for s in range(int(math.log(scale, 2))):
            cin = filters if s == 0 else last_filters // 4
            cout = last_filters
            key, kw, kb = jax.random.split(key, 3)
            w = 0.1 * jax.random.normal(kw, (cout, cin, 3, 3), jnp.float32)
            bb = 0.1 * jax.random.normal(kb, (cout,), jnp.float32)
            params.append((w, bb))
    elif scale == 3:
        cout = last_filters // 4 * 9
        key, kw, kb = jax.random.split(key, 3)
        w = 0.1 * jax.random.normal(kw, (cout, filters, 3, 3), jnp.float32)
        bb = 0.1 * jax.random.normal(kb, (cout,), jnp.float32)
        params.append((w, bb))
    return params


def upsample_block_forward(x_nchw, params, scale):
    x = x_nchw
    if scale in (2, 4, 8):
        for (w_oihw, bb) in params:
            x = conv3x3_relu(x, w_oihw, bb)
            x = pixel_shuffle_nchw(x, 2)
    elif scale == 3:
        (w_oihw, bb), = params
        x = conv3x3_relu(x, w_oihw, bb)
        x = pixel_shuffle_nchw(x, 3)
    return x


# ----------------------------------------------------------------------------
# Pure-JAX reference (for correctness check)
# ----------------------------------------------------------------------------
def _reference_forward(x_nchw, params, scale):
    def conv_relu(x, w, bb):
        y = lax.conv_general_dilated(
            x, w, window_strides=(1, 1), padding=((1, 1), (1, 1)),
            dimension_numbers=("NCHW", "OIHW", "NCHW"))
        return jnp.maximum(y + bb[None, :, None, None], 0.0)

    def ps(x, r):
        N, C, H, W = x.shape
        x = x.reshape(N, C // (r * r), r, r, H, W)
        x = jnp.transpose(x, (0, 1, 4, 2, 5, 3))
        return x.reshape(N, C // (r * r), H * r, W * r)

    if scale in (2, 4, 8):
        for (w, bb) in params:
            x_nchw = ps(conv_relu(x_nchw, w, bb), 2)
    elif scale == 3:
        (w, bb), = params
        x_nchw = ps(conv_relu(x_nchw, w, bb), 3)
    return x_nchw


if __name__ == "__main__":
    # Small shapes consistent with the module: filters=4, last_filters=8, scale=2
    N, filters, last_filters, H, W = 2, 4, 8, 16, 16
    scale = 2

    key = jax.random.PRNGKey(0)
    kx, kp = jax.random.split(key)
    x = jax.random.normal(kx, (N, filters, H, W), jnp.float32)
    params = init_params(kp, filters, last_filters, scale)

    fwd = jax.jit(partial(upsample_block_forward, scale=scale))
    out = jax.block_until_ready(fwd(x, params))

    ref = jax.block_until_ready(_reference_forward(x, params, scale))
    assert out.shape == (N, last_filters // 4, H * scale, W * scale), out.shape
    assert jnp.allclose(out, ref, atol=1e-4, rtol=1e-4), "mismatch vs reference"

    print("KERNEL_OK")
</pallas_src>

<mosaic_0001>
module attributes {stable_mosaic.version = 11 : i64} {
  func.func @kernel(%arg0: i32, %arg1: memref<1x4x256xf32, #tpu.memory_space<vmem>>, %arg2: memref<9x8x4xf32, #tpu.memory_space<vmem>>, %arg3: memref<8x1xf32, #tpu.memory_space<vmem>>, %arg4: memref<1x8x256xf32, #tpu.memory_space<vmem>>, %arg5: memref<4x512xf32, #tpu.memory_space<vmem>>) attributes {dimension_semantics = [#tpu.dimension_semantics<parallel>], iteration_bounds = array<i64: 2>, scalar_prefetch = 0 : i64, scratch_operands = 1 : i64, tpu.core_type = #tpu.core_type<tc>, window_params = [{transform_indices = @transform_0, window_bounds = array<i64: 1, 4, 256>}, {pipeline_mode = #tpu.pipeline_mode<synchronous>, transform_indices = @transform_1, window_bounds = array<i64: 9, 8, 4>}, {pipeline_mode = #tpu.pipeline_mode<synchronous>, transform_indices = @transform_2, window_bounds = array<i64: 8, 1>}, {transform_indices = @transform_3, window_bounds = array<i64: 1, 8, 256>}]} {
    %cst = arith.constant 0.000000e+00 : f32
    %0 = vector.broadcast %cst : f32 to vector<4x128xf32>
    %c0 = arith.constant 0 : index
    %c0_0 = arith.constant 0 : index
    %1 = vector.load %arg5[%c0, %c0_0] : memref<4x512xf32, #tpu.memory_space<vmem>>, vector<4x128xf32>
    tpu.vector_store %arg5[%c0, %c0_0], %0 {strides = array<i32>} : memref<4x512xf32, #tpu.memory_space<vmem>>, vector<4x128xf32>,
    %cst_1 = arith.constant 0.000000e+00 : f32
    %2 = vector.broadcast %cst_1 : f32 to vector<4x128xf32>
    %c0_2 = arith.constant 0 : index
    %c384 = arith.constant 384 : index
    %3 = vector.load %arg5[%c0_2, %c384] : memref<4x512xf32, #tpu.memory_space<vmem>>, vector<4x128xf32>
    tpu.vector_store %arg5[%c0_2, %c384], %2 {strides = array<i32>} : memref<4x512xf32, #tpu.memory_space<vmem>>, vector<4x128xf32>,
    %c0_3 = arith.constant 0 : index
    %c0_4 = arith.constant 0 : index
    %c0_5 = arith.constant 0 : index
    %4 = vector.load %arg1[%c0_3, %c0_4, %c0_5] : memref<1x4x256xf32, #tpu.memory_space<vmem>>, vector<1x4x256xf32>
    %5 = vector.shape_cast %4 : vector<1x4x256xf32> to vector<4x256xf32>
    %c0_6 = arith.constant 0 : index
    %c128 = arith.constant 128 : index
    %6 = vector.load %arg5[%c0_6, %c128] : memref<4x512xf32, #tpu.memory_space<vmem>>, vector<4x256xf32>
    tpu.vector_store %arg5[%c0_6, %c128], %5 {strides = array<i32>} : memref<4x512xf32, #tpu.memory_space<vmem>>, vector<4x256xf32>,
    %7 = tpu.iota {dimensions = array<i32: 1>} : vector<4x256xi32>
    %c16_i32 = arith.constant 16 : i32
    %c0_i32 = arith.constant 0 : i32
    %8 = arith.cmpi eq, %c16_i32, %c0_i32 : i32
    %c1_i32 = arith.constant 1 : i32
    %9 = arith.select %8, %c1_i32, %c16_i32 : i32
    %10 = vector.broadcast %9 : i32 to vector<4x256xi32>
    %11 = arith.remsi %7, %10 : vector<4x256xi32>
    %c0_i32_7 = arith.constant 0 : i32
    %12 = vector.broadcast %c0_i32_7 : i32 to vector<4x256xi32>
    %13 = arith.cmpi ne, %11, %12 : vector<4x256xi32>
    %c0_i32_8 = arith.constant 0 : i32
    %14 = vector.broadcast %c0_i32_8 : i32 to vector<4x256xi32>
    %15 = arith.cmpi slt, %11, %14 : vector<4x256xi32>
    %c0_i32_9 = arith.constant 0 : i32
    %16 = arith.cmpi slt, %9, %c0_i32_9 : i32
    %17 = vector.broadcast %16 : i1 to vector<4x256xi1>
    %18 = vector.broadcast %17 : vector<4x256xi1> to vector<4x256xi1>
    %19 = arith.xori %15, %18 : vector<4x256xi1>
    %20 = arith.andi %19, %13 : vector<4x256xi1>
    %21 = vector.broadcast %9 : i32 to vector<4x256xi32>
    %22 = arith.addi %11, %21 : vector<4x256xi32>
    %23 = arith.select %20, %22, %11 : vector<4x256xi1>, vector<4x256xi32>
    %c0_i32_10 = arith.constant 0 : i32
    %24 = vector.broadcast %c0_i32_10 : i32 to vector<4x256xi32>
    %25 = arith.cmpi ne, %23, %24 : vector<4x256xi32>
    %c15_i32 = arith.constant 15 : i32
    %26 = vector.broadcast %c15_i32 : i32 to vector<4x256xi32>
    %27 = arith.cmpi ne, %23, %26 : vector<4x256xi32>
    %cst_11 = arith.constant 0.000000e+00 : f32
    %28 = vector.broadcast %cst_11 : f32 to vector<8x256xf32>
    %c0_12 = arith.constant 0 : index
    %c111 = arith.constant 111 : index
    %29 = vector.load %arg5[%c0_12, %c111] : memref<4x512xf32, #tpu.memory_space<vmem>>, vector<4x256xf32>
    %cst_13 = arith.constant 0.000000e+00 : f32
    %30 = vector.broadcast %cst_13 : f32 to vector<4x256xf32>
    %31 = arith.select %25, %29, %30 : vector<4x256xi1>, vector<4x256xf32>
    %c0_14 = arith.constant 0 : index
    %c0_15 = arith.constant 0 : index
    %c0_16 = arith.constant 0 : index
    %32 = vector.load %arg2[%c0_14, %c0_15, %c0_16] : memref<9x8x4xf32, #tpu.memory_space<vmem>>, vector<1x8x4xf32>
    %33 = vector.shape_cast %32 : vector<1x8x4xf32> to vector<8x4xf32>
    %cst_17 = arith.constant dense<0.000000e+00> : vector<8x256xf32>
    %34 = tpu.matmul %33, %31, %cst_17 {dimension_numbers = #tpu.dot_dimension_numbers<[1], [0], [0], [1], [0, 0, 1, 1], [], []>} : vector<8x4xf32>, vector<4x256xf32>, vector<8x256xf32> -> vector<8x256xf32>
    %35 = arith.addf %28, %34 : vector<8x256xf32>
    %c0_18 = arith.constant 0 : index
    %c112 = arith.constant 112 : index
    %36 = vector.load %arg5[%c0_18, %c112] : memref<4x512xf32, #tpu.memory_space<vmem>>, vector<4x256xf32>
    %c1 = arith.constant 1 : index
    %c0_19 = arith.constant 0 : index
    %c0_20 = arith.constant 0 : index
    %37 = vector.load %arg2[%c1, %c0_19, %c0_20] : memref<9x8x4xf32, #tpu.memory_space<vmem>>, vector<1x8x4xf32>
    %38 = vector.shape_cast %37 : vector<1x8x4xf32> to vector<8x4xf32>
    %cst_21 = arith.constant dense<0.000000e+00> : vector<8x256xf32>
    %39 = tpu.matmul %38, %36, %cst_21 {dimension_numbers = #tpu.dot_dimension_numbers<[1], [0], [0], [1], [0, 0, 1, 1], [], []>} : vector<8x4xf32>, vector<4x256xf32>, vector<8x256xf32> -> vector<8x256xf32>
    %40 = arith.addf %35, %39 : vector<8x256xf32>
    %c0_22 = arith.constant 0 : index
    %c113 = arith.constant 113 : index
    %41 = vector.load %arg5[%c0_22, %c113] : memref<4x512xf32, #tpu.memory_space<vmem>>, vector<4x256xf32>
    %cst_23 = arith.constant 0.000000e+00 : f32
    %42 = vector.broadcast %cst_23 : f32 to vector<4x256xf32>
    %43 = arith.select %27, %41, %42 : vector<4x256xi1>, vector<4x256xf32>
    %c2 = arith.constant 2 : index
    %c0_24 = arith.constant 0 : index
    %c0_25 = arith.constant 0 : index
    %44 = vector.load %arg2[%c2, %c0_24, %c0_25] : memref<9x8x4xf32, #tpu.memory_space<vmem>>, vector<1x8x4xf32>
    %45 = vector.shape_cast %44 : vector<1x8x4xf32> to vector<8x4xf32>
    %cst_26 = arith.constant dense<0.000000e+00> : vector<8x256xf32>
    %46 = tpu.matmul %45, %43, %cst_26 {dimension_numbers = #tpu.dot_dimension_numbers<[1], [0], [0], [1], [0, 0, 1, 1], [], []>} : vector<8x4xf32>, vector<4x256xf32>, vector<8x256xf32> -> vector<8x256xf32>
    %47 = arith.addf %40, %46 : vector<8x256xf32>
    %c0_27 = arith.constant 0 : index
    %c127 = arith.constant 127 : index
    %48 = vector.load %arg5[%c0_27, %c127] : memref<4x512xf32, #tpu.memory_space<vmem>>, vector<4x256xf32>
    %cst_28 = arith.constant 0.000000e+00 : f32
    %49 = vector.broadcast %cst_28 : f32 to vector<4x256xf32>
    %50 = arith.select %25, %48, %49 : vector<4x256xi1>, vector<4x256xf32>
    %c3 = arith.constant 3 : index
    %c0_29 = arith.constant 0 : index
    %c0_30 = arith.constant 0 : index
    %51 = vector.load %arg2[%c3, %c0_29, %c0_30] : memref<9x8x4xf32, #tpu.memory_space<vmem>>, vector<1x8x4xf32>
    %52 = vector.shape_cast %51 : vector<1x8x4xf32> to vector<8x4xf32>
    %cst_31 = arith.constant dense<0.000000e+00> : vector<8x256xf32>
    %53 = tpu.matmul %52, %50, %cst_31 {dimension_numbers = #tpu.dot_dimension_numbers<[1], [0], [0], [1], [0, 0, 1, 1], [], []>} : vector<8x4xf32>, vector<4x256xf32>, vector<8x256xf32> -> vector<8x256xf32>
    %54 = arith.addf %47, %53 : vector<8x256xf32>
    %c0_32 = arith.constant 0 : index
    %c128_33 = arith.constant 128 : index
    %55 = vector.load %arg5[%c0_32, %c128_33] : memref<4x512xf32, #tpu.memory_space<vmem>>, vector<4x256xf32>
    %c4 = arith.constant 4 : index
    %c0_34 = arith.constant 0 : index
    %c0_35 = arith.constant 0 : index
    %56 = vector.load %arg2[%c4, %c0_34, %c0_35] : memref<9x8x4xf32, #tpu.memory_space<vmem>>, vector<1x8x4xf32>
    %57 = vector.shape_cast %56 : vector<1x8x4xf32> to vector<8x4xf32>
    %cst_36 = arith.constant dense<0.000000e+00> : vector<8x256xf32>
    %58 = tpu.matmul %57, %55, %cst_36 {dimension_numbers = #tpu.dot_dimension_numbers<[1], [0], [0], [1], [0, 0, 1, 1], [], []>} : vector<8x4xf32>, vector<4x256xf32>, vector<8x256xf32> -> vector<8x256xf32>
    %59 = arith.addf %54, %58 : vector<8x256xf32>
    %c0_37 = arith.constant 0 : index
    %c129 = arith.constant 129 : index
    %60 = vector.load %arg5[%c0_37, %c129] : memref<4x512xf32, #tpu.memory_space<vmem>>, vector<4x256xf32>
    %cst_38 = arith.constant 0.000000e+00 : f32
    %61 = vector.broadcast %cst_38 : f32 to vector<4x256xf32>
    %62 = arith.select %27, %60, %61 : vector<4x256xi1>, vector<4x256xf32>
    %c5 = arith.constant 5 : index
    %c0_39 = arith.constant 0 : index
    %c0_40 = arith.constant 0 : index
    %63 = vector.load %arg2[%c5, %c0_39, %c0_40] : memref<9x8x4xf32, #tpu.memory_space<vmem>>, vector<1x8x4xf32>
    %64 = vector.shape_cast %63 : vector<1x8x4xf32> to vector<8x4xf32>
    %cst_41 = arith.constant dense<0.000000e+00> : vector<8x256xf32>
    %65 = tpu.matmul %64, %62, %cst_41 {dimension_numbers = #tpu.dot_dimension_numbers<[1], [0], [0], [1], [0, 0, 1, 1], [], []>} : vector<8x4xf32>, vector<4x256xf32>, vector<8x256xf32> -> vector<8x256xf32>
    %66 = arith.addf %59, %65 : vector<8x256xf32>
    %c0_42 = arith.constant 0 : index
    %c143 = arith.constant 143 : index
    %67 = vector.load %arg5[%c0_42, %c143] : memref<4x512xf32, #tpu.memory_space<vmem>>, vector<4x256xf32>
    %cst_43 = arith.constant 0.000000e+00 : f32
    %68 = vector.broadcast %cst_43 : f32 to vector<4x256xf32>
    %69 = arith.select %25, %67, %68 : vector<4x256xi1>, vector<4x256xf32>
    %c6 = arith.constant 6 : index
    %c0_44 = arith.constant 0 : index
    %c0_45 = arith.constant 0 : index
    %70 = vector.load %arg2[%c6, %c0_44, %c0_45] : memref<9x8x4xf32, #tpu.memory_space<vmem>>, vector<1x8x4xf32>
    %71 = vector.shape_cast %70 : vector<1x8x4xf32> to vector<8x4xf32>
    %cst_46 = arith.constant dense<0.000000e+00> : vector<8x256xf32>
    %72 = tpu.matmul %71, %69, %cst_46 {dimension_numbers = #tpu.dot_dimension_numbers<[1], [0], [0], [1], [0, 0, 1, 1], [], []>} : vector<8x4xf32>, vector<4x256xf32>, vector<8x256xf32> -> vector<8x256xf32>
    %73 = arith.addf %66, %72 : vector<8x256xf32>
    %c0_47 = arith.constant 0 : index
    %c144 = arith.constant 144 : index
    %74 = vector.load %arg5[%c0_47, %c144] : memref<4x512xf32, #tpu.memory_space<vmem>>, vector<4x256xf32>
    %c7 = arith.constant 7 : index
    %c0_48 = arith.constant 0 : index
    %c0_49 = arith.constant 0 : index
    %75 = vector.load %arg2[%c7, %c0_48, %c0_49] : memref<9x8x4xf32, #tpu.memory_space<vmem>>, vector<1x8x4xf32>
    %76 = vector.shape_cast %75 : vector<1x8x4xf32> to vector<8x4xf32>
    %cst_50 = arith.constant dense<0.000000e+00> : vector<8x256xf32>
    %77 = tpu.matmul %76, %74, %cst_50 {dimension_numbers = #tpu.dot_dimension_numbers<[1], [0], [0], [1], [0, 0, 1, 1], [], []>} : vector<8x4xf32>, vector<4x256xf32>, vector<8x256xf32> -> vector<8x256xf32>
    %78 = arith.addf %73, %77 : vector<8x256xf32>
    %c0_51 = arith.constant 0 : index
    %c145 = arith.constant 145 : index
    %79 = vector.load %arg5[%c0_51, %c145] : memref<4x512xf32, #tpu.memory_space<vmem>>, vector<4x256xf32>
    %cst_52 = arith.constant 0.000000e+00 : f32
    %80 = vector.broadcast %cst_52 : f32 to vector<4x256xf32>
    %81 = arith.select %27, %79, %80 : vector<4x256xi1>, vector<4x256xf32>
    %c8 = arith.constant 8 : index
    %c0_53 = arith.constant 0 : index
    %c0_54 = arith.constant 0 : index
    %82 = vector.load %arg2[%c8, %c0_53, %c0_54] : memref<9x8x4xf32, #tpu.memory_space<vmem>>, vector<1x8x4xf32>
    %83 = vector.shape_cast %82 : vector<1x8x4xf32> to vector<8x4xf32>
    %cst_55 = arith.constant dense<0.000000e+00> : vector<8x256xf32>
    %84 = tpu.matmul %83, %81, %cst_55 {dimension_numbers = #tpu.dot_dimension_numbers<[1], [0], [0], [1], [0, 0, 1, 1], [], []>} : vector<8x4xf32>, vector<4x256xf32>, vector<8x256xf32> -> vector<8x256xf32>
    %85 = arith.addf %78, %84 : vector<8x256xf32>
    %c0_56 = arith.constant 0 : index
    %c0_57 = arith.constant 0 : index
    %86 = vector.load %arg3[%c0_56, %c0_57] : memref<8x1xf32, #tpu.memory_space<vmem>>, vector<8x1xf32>
    %87 = vector.broadcast %86 : vector<8x1xf32> to vector<8x256xf32>
    %88 = arith.addf %85, %87 : vector<8x256xf32>
    %cst_58 = arith.constant 0.000000e+00 : f32
    %89 = vector.broadcast %cst_58 : f32 to vector<8x256xf32>
    %90 = arith.maximumf %88, %89 : vector<8x256xf32>
    %91 = vector.shape_cast %90 : vector<8x256xf32> to vector<1x8x256xf32>
    %c0_59 = arith.constant 0 : index
    %c0_60 = arith.constant 0 : index
    %c0_61 = arith.constant 0 : index
    %92 = vector.load %arg4[%c0_59, %c0_60, %c0_61] : memref<1x8x256xf32, #tpu.memory_space<vmem>>, vector<1x8x256xf32>
    tpu.vector_store %arg4[%c0_59, %c0_60, %c0_61], %91 {strides = array<i32>} : memref<1x8x256xf32, #tpu.memory_space<vmem>>, vector<1x8x256xf32>,
    return
  }
  func.func @transform_0(%arg0: i32) -> (i32, i32, i32) {
    %c0_i32 = arith.constant 0 : i32
    %c0_i32_0 = arith.constant 0 : i32
    %c0_i32_1 = arith.constant 0 : i32
    return %arg0, %c0_i32, %c0_i32_0 : i32, i32, i32
  }
  func.func @transform_1(%arg0: i32) -> (i32, i32, i32) {
    %c0_i32 = arith.constant 0 : i32
    %c0_i32_0 = arith.constant 0 : i32
    %c0_i32_1 = arith.constant 0 : i32
    %c0_i32_2 = arith.constant 0 : i32
    return %c0_i32, %c0_i32_0, %c0_i32_1 : i32, i32, i32
  }
  func.func @transform_2(%arg0: i32) -> (i32, i32) {
    %c0_i32 = arith.constant 0 : i32
    %c0_i32_0 = arith.constant 0 : i32
    %c0_i32_1 = arith.constant 0 : i32
    return %c0_i32, %c0_i32_0 : i32, i32
  }
  func.func @transform_3(%arg0: i32) -> (i32, i32, i32) {
    %c0_i32 = arith.constant 0 : i32
    %c0_i32_0 = arith.constant 0 : i32
    %c0_i32_1 = arith.constant 0 : i32
    return %arg0, %c0_i32, %c0_i32_0 : i32, i32, i32
  }
}

</mosaic_0001>

<llo_original>
// kernel: upsample_block_forward.1
$region0: #{upsample_block_forward.1}
  #allocation0 [shape = 'u32[]', space=smem, size = 0x4, offset = 0x4, fixed_abs, tag = 'smem constant byte address 0x4 - core index']
  #allocation1 [shape = 'u32[72,128]{1,0:T(1,128)}', space=vmem, size = 0x9000, scoped, tag = 'internal scratch']
  #allocation2 [shape = 'f32[4,512]{1,0:T(4,128)}', space=vmem, size = 0x2000, scoped, tag = 'scratch operand']
  %s0 = inlined_call_operand.vmem [shape: f32[2,4,256], index: 0, kind: input, shape index: {}]
  %s1 = inlined_call_operand.vmem [shape: f32[9,8,4], index: 1, kind: input, shape index: {}]
  %s2 = inlined_call_operand.vmem [shape: f32[8,1], index: 2, kind: input, shape index: {}]
  %s3 = inlined_call_operand.vmem [shape: f32[2,8,256], index: 3, kind: output, shape index: {}]
  %s4 = sld [smem:[#allocation0]]
  $region45: #{upsample_block_forward.1} parent=0
    _
  %s6 = ssub.s32 1, %s4
  %s7 = scalar_select 0, %s6, %s4
  loop: start=0, step=1, limit=4
  $region2: #{upsample_block_forward.1} parent=0 // loop_pre_header
    _
  $region3: #{upsample_block_forward.1} parent=0 // loop_header
    %s9 = sphi 0, %s13
    %p10 = scmp.ge.s32.totalorder %s9, 4
    %s19 = sphi 0, %s21
    %s22 = sphi 0, %s19
    %s23 = sphi 0, %s22
    %s39 = sphi 0, %s23
    %s43 = sphi 0, %s43
    %s45 = sphi 0, %s43
    %s46 = sphi 0, %s45
    %s60 = sphi 0, %s46
    %s64 = sphi 0, %s64
    %s66 = sphi 0, %s64
    %s67 = sphi 0, %s66
    %s81 = sphi 0, %s67
    %s87 = sphi 0, %s89
    %s90 = sphi 0, %s87
    %s91 = sphi 0, %s90
    %s107 = sphi 0, %s91
  $region4: #{upsample_block_forward.1} parent=0 // loop_header_branch
    %12 = sbr.rel (%p10) target = $region8
  $region5: #{upsample_block_forward.1} parent=0 // loop_body
    %s14 = ssub.s32 %s9, 1
    %s15 = ssub.s32 %s9, 2
    %s16 = sadd.s32 %s9, 1
    %s17 = ssub.s32 %s9, %s16
    %p18 = scmp.eq.s32.totalorder %s17, 0
    %s20 = sadd.s32 %s19, 1
    %s21 = scalar_select %p18, %s19, %s20
    %p24 = pneg %p18
    %p25 = scmp.eq.s32.totalorder %s9, 1
    %p26 = por %p24, %p25
    %p27 = scmp.ne.s32.totalorder %s19, %s22
    %p28 = scmp.eq.s32.totalorder %s9, 0
    %p29 = por %p27, %p28
    %p30 = scmp.ne.s32.totalorder %s19, %s22
    %p31 = scmp.eq.s32.totalorder %s14, 1
    %p32 = por %p30, %p31
    %p33 = scmp.ne.s32.totalorder %s22, %s23
    %p34 = scmp.eq.s32.totalorder %s14, 0
    %p35 = por %p33, %p34
    %p36 = scmp.ne.s32.totalorder %s22, %s23
    %p37 = scmp.eq.s32.totalorder %s15, 1
    %p38 = por %p36, %p37
    %p40 = scmp.ne.s32.totalorder %s23, %s39
    %p41 = scmp.eq.s32.totalorder %s15, 0
    %p42 = por %p40, %p41
    %s44 = sadd.s32 %s43, 1
    %p47 = scmp.eq.s32.totalorder %s9, 1
    %p48 = scmp.ne.s32.totalorder %s43, %s45
    %p49 = scmp.eq.s32.totalorder %s9, 0
    %p50 = por %p48, %p49
    %p51 = scmp.ne.s32.totalorder %s43, %s45
    %p52 = scmp.eq.s32.totalorder %s14, 1
    %p53 = por %p51, %p52
    %p54 = scmp.ne.s32.totalorder %s45, %s46
    %p55 = scmp.eq.s32.totalorder %s14, 0
    %p56 = por %p54, %p55
    %p57 = scmp.ne.s32.totalorder %s45, %s46
    %p58 = scmp.eq.s32.totalorder %s15, 1
    %p59 = por %p57, %p58
    %p61 = scmp.ne.s32.totalorder %s46, %s60
    %p62 = scmp.eq.s32.totalorder %s15, 0
    %p63 = por %p61, %p62
    %s65 = sadd.s32 %s64, 1
    %p68 = scmp.eq.s32.totalorder %s9, 1
    %p69 = scmp.ne.s32.totalorder %s64, %s66
    %p70 = scmp.eq.s32.totalorder %s9, 0
    %p71 = por %p69, %p70
    %p72 = scmp.ne.s32.totalorder %s64, %s66
    %p73 = scmp.eq.s32.totalorder %s14, 1
    %p74 = por %p72, %p73
    %p75 = scmp.ne.s32.totalorder %s66, %s67
    %p76 = scmp.eq.s32.totalorder %s14, 0
    %p77 = por %p75, %p76
    %p78 = scmp.ne.s32.totalorder %s66, %s67
    %p79 = scmp.eq.s32.totalorder %s15, 1
    %p80 = por %p78, %p79
    %p82 = scmp.ne.s32.totalorder %s67, %s81
    %p83 = scmp.eq.s32.totalorder %s15, 0
    %p84 = por %p82, %p83
    %s85 = ssub.s32 %s9, %s16
    %p86 = scmp.eq.s32.totalorder %s85, 0
    %s88 = sadd.s32 %s87, 1
    %s89 = scalar_select %p86, %s87, %s88
    %p92 = pneg %p86
    %p93 = scmp.eq.s32.totalorder %s9, 1
    %p94 = por %p92, %p93
    %p95 = scmp.ne.s32.totalorder %s87, %s90
    %p96 = scmp.eq.s32.totalorder %s9, 0
    %p97 = por %p95, %p96
    %p98 = scmp.ne.s32.totalorder %s87, %s90
    %p99 = scmp.eq.s32.totalorder %s14, 1
    %p100 = por %p98, %p99
    %p101 = scmp.ne.s32.totalorder %s90, %s91
    %p102 = scmp.eq.s32.totalorder %s14, 0
    %p103 = por %p101, %p102
    %p104 = scmp.ne.s32.totalorder %s90, %s91
    %p105 = scmp.eq.s32.totalorder %s15, 1
    %p106 = por %p104, %p105
    %p108 = scmp.ne.s32.totalorder %s91, %s107
    %p109 = scmp.eq.s32.totalorder %s15, 0
    %p110 = por %p108, %p109
    %p111 = scmp.le.s32.totalorder 1, %s9
    %p112 = scmp.lt.s32.totalorder %s9, 3
    %p113 = pnand %p111, %p112
    %p114 = pneg %p113
    // Predicated region
    $region9: #{upsample_block_forward.1} parent=5 // pred_check
      _
    $region10: #{upsample_block_forward.1} parent=5 // pred_check_branch
      %116 = sbr.rel (%p113) target = $region12
    $region11: #{upsample_block_forward.1} parent=5 // pred_region
      %s117 = ssub.s32 %s9, 1
      // Predicated region
      $region13: #{upsample_block_forward.1} parent=11 // pred_check
        %p118 = pneg %p56
      $region14: #{upsample_block_forward.1} parent=11 // pred_check_branch
        %120 = sbr.rel (%p118) target = $region16
      $region15: #{upsample_block_forward.1} parent=11 // pred_region
        _
      $region16: #{upsample_block_forward.1} parent=11 // pred_fallthru
        _
      // Predicated region
      $region17: #{upsample_block_forward.1} parent=11 // pred_check
        %p121 = pneg %p77
      $region18: #{upsample_block_forward.1} parent=11 // pred_check_branch
        %123 = sbr.rel (%p121) target = $region20
      $region19: #{upsample_block_forward.1} parent=11 // pred_region
        _
      $region20: #{upsample_block_forward.1} parent=11 // pred_fallthru
        _
    $region12: #{upsample_block_forward.1} parent=5 // pred_fallthru
      _
    %p124 = scmp.lt.s32.totalorder %s9, 2
    // Predicated region
    $region21: #{upsample_block_forward.1} parent=5 // pred_check
      %p125 = pneg %p124
    $region22: #{upsample_block_forward.1} parent=5 // pred_check_branch
      %127 = sbr.rel (%p125) target = $region24
    $region23: #{upsample_block_forward.1} parent=5 // pred_region
      // Predicated region
      $region25: #{upsample_block_forward.1} parent=23 // pred_check
        %p128 = pneg %p29
      $region26: #{upsample_block_forward.1} parent=23 // pred_check_branch
        %130 = sbr.rel (%p128) target = $region28
      $region27: #{upsample_block_forward.1} parent=23 // pred_region
        %p131 = scmp.lt.s32.totalorder %s9, 1
        %s132 = scalar_select %p131, %s9, 1
        %s133 = smul.addr %s132, 2
        %s134 = smul.addr %s133, 4
        %s135 = scalar_lea.vmem %s0, %s134
      $region28: #{upsample_block_forward.1} parent=23 // pred_fallthru
        _
    $region24: #{upsample_block_forward.1} parent=5 // pred_fallthru
      _
    %p136 = scmp.le.s32.totalorder 1, %s9
    %p137 = scmp.lt.s32.totalorder %s9, 3
    %p138 = pnand %p136, %p137
    %p139 = pneg %p138
    // Predicated region
    $region29: #{upsample_block_forward.1} parent=5 // pred_check
      _
    $region30: #{upsample_block_forward.1} parent=5 // pred_check_branch
      %141 = sbr.rel (%p138) target = $region32
    $region31: #{upsample_block_forward.1} parent=5 // pred_region
      %s142 = ssub.s32 %s9, 1
      %p143 = scmp.lt.s32.totalorder %s14, 1
      %s144 = scalar_select %p143, %s14, 1
      %s145 = smul.addr %s144, 2
      %s146 = smul.addr %s145, 4
      %s147 = scalar_lea.vmem %s0, %s146
      %p148 = pneg %p35
      %p149 = pneg %p32
      %p150 = pneg %p56
      %p151 = pneg %p53
      %p152 = pneg %p77
      %p153 = pneg %p74
      %p154 = pneg %p103
      %p155 = pneg %p100
      %p156 = scmp.lt.s32.totalorder %s14, 1
      %s157 = scalar_select %p156, %s14, 1
      %s158 = smul.addr %s157, 2
      %s159 = smul.addr %s158, 8
      %s160 = scalar_lea.vmem %s3, %s159
      %p161 = scmp.lt.s32.totalorder %s14, 1
      %s162 = scalar_select %p161, %s14, 1
      %s163 = smul.addr %s162, 2
      %s164 = smul.addr %s163, 4
      %s165 = scalar_lea.vmem %s0, %s164
      %p166 = scmp.lt.s32.totalorder %s14, 1
      %s167 = scalar_select %p166, %s14, 1
      %s168 = smul.addr %s167, 2
      %s169 = smul.addr %s168, 8
      %s170 = scalar_lea.vmem %s3, %s169
      %171 = vst [vmem:[#allocation2] sm:$0xf] 0.0
      %172 = vst [vmem:[#allocation2 + $0xc] sm:$0xf] 0.0
      %v173 = vld [vmem:[%s165] sm:$0xff]
      %174 = vst [vmem:[#allocation2 + $0x4] sm:$0xff] %v173
      %v175 = vlaneseq
      %v176 = vand.u32 %v175, 127
      %v177 = vadd.s32 %v176, 128
      %vm178 = vcmp.lt.s32.totalorder %v176, 0
      %v179 = vsub.s32 0, %v176
      %v180 = vsel %vm178, %v179, %v176
      %v181 = vshrl.u32 %v180, 4
      %v182 = vand.u32 %v180, 15
      %v183 = vsub.s32 0, %v182
      %v184 = vsel %vm178, %v183, %v182
      %vm185 = vcmp.lt.s32.totalorder %v177, 0
      %v186 = vsub.s32 0, %v177
      %v187 = vsel %vm185, %v186, %v177
      %v188 = vshrl.u32 %v187, 4
      %v189 = vand.u32 %v187, 15
      %v190 = vsub.s32 0, %v189
      %v191 = vsel %vm185, %v190, %v189
      %vm192 = vcmp.ne.s32.totalorder %v184, 0
      %vm193 = vcmp.ne.s32.totalorder %v191, 0
      %vm194 = vcmp.lt.s32.totalorder %v184, 0
      %vm195 = vcmp.lt.s32.totalorder %v191, 0
      %vm196 = vmand %vm194, %vm192
      %vm197 = vmand %vm195, %vm193
      %v198 = vadd.s32 %v184, 16
      %v199 = vadd.s32 %v191, 16
      %v200 = vsel %vm196, %v198, %v184
      %v201 = vsel %vm197, %v199, %v191
      %vm202 = vcmp.ne.s32.totalorder %v200, 0
      %vm203 = vcmp.ne.s32.totalorder %v201, 0
      %vm204 = vcmp.ne.s32.totalorder %v200, 15
      %vm205 = vcmp.ne.s32.totalorder %v201, 15
      %v206 = vld [vmem:[#allocation2] sm:$0xff]
      %v207 = vld [vmem:[#allocation2 + $0x8] sm:$0xf]
      %210 = vst [vmem:[#allocation1] ss:$2 sm:$0xff] %v206
      %s211 = scalar_lea.vmem [#allocation1], 16
      %212 = vst [vmem:[%s211] ss:$2 sm:$0xff] %v207
      %v213 = vld.sshfl [vmem:[#allocation1] sm:$0xff pattern:$0x75316420]
      %v214 = vld.sshfl [vmem:[#allocation1 + $0x8] sm:$0xff pattern:$0x75316420]
      %v215 = vld.sshfl [vmem:[#allocation1 + $0x10] sm:$0xff pattern:$0x75316420]
      %216 = vrot.lane.b32.xlu0 %v213, 17
      %v217 = vpop.permute.xlu0 %216
      %218 = vrot.lane.b32.xlu0 %v214, 17
      %v219 = vpop.permute.xlu0 %218
      %220 = vrot.lane.b32.xlu0 %v215, 17
      %v221 = vpop.permute.xlu0 %220
      %vm222 = vcmask 138240
      %v223 = vsel %vm222, %v217, %v219
      %v224 = vsel %vm222, %v219, %v221
      %v227 = vsel %vm202, %v223, 0.0
      %v228 = vsel %vm203, %v224, 0.0
      %v229 = vld [vmem:[%s1] sm:$0xff]
      %v230 = vld [vmem:[#allocation2] sm:$0xff]
      %v231 = vld [vmem:[#allocation2 + $0x8] sm:$0xf]
      %s232 = scalar_lea.vmem %s1, 8
      %v233 = vld [vmem:[%s232] sm:$0xff]
      %236 = vst [vmem:[#allocation1] ss:$2 sm:$0xff] %v230
      %s237 = scalar_lea.vmem [#allocation1], 16
      %238 = vst [vmem:[%s237] ss:$2 sm:$0xff] %v231
      %v239 = vld.sshfl [vmem:[#allocation1] sm:$0xff pattern:$0x75316420]
      %v240 = vld.sshfl [vmem:[#allocation1 + $0x8] sm:$0xff pattern:$0x75316420]
      %v241 = vld.sshfl [vmem:[#allocation1 + $0x10] sm:$0xff pattern:$0x75316420]
      %242 = vrot.lane.b32.xlu0 %v239, 16
      %v243 = vpop.permute.xlu0 %242
      %244 = vrot.lane.b32.xlu0 %v240, 16
      %v245 = vpop.permute.xlu0 %244
      %246 = vrot.lane.b32.xlu0 %v241, 16
      %v247 = vpop.permute.xlu0 %246
      %vm248 = vcmask 130048
      %v249 = vsel %vm248, %v243, %v245
      %v250 = vsel %vm248, %v245, %v247
      %vm251 = vcmask 31744
      %v253 = vsel %vm251, %v233, 0
      %vm255 = vcmask 1043456
      %v256 = vsel %vm255, %v249, 0
      %v258 = vsel %vm255, %v250, 0
      %260 = vmatpush.msra.mxu0 0.0
      %261 = vmatpush.msra.mxu0 0.0
      %262 = vmatpush.msra.mxu0 0.0
      %263 = vmatpush.msra.mxu0 0.0
      %264 = vmatpush.msra.mxu0 0.0
      %265 = vmatpush.msra.mxu0 0.0
      %266 = vmatpush.msra.mxu0 0.0
      %267 = vmatpush.msra.mxu0 0.0
      %268 = vmatpush.msra.mxu0 0.0
      %269 = vmatpush.msra.mxu0 0.0
      %270 = vmatpush.msra.mxu0 0.0
      %271 = vmatpush.msra.mxu0 0.0
      %272 = vmatpush.msra.mxu0 0.0
      %273 = vmatpush.msra.mxu0 0.0
      %274 = vmatpush.msra.mxu0 0.0
      %275 = vmatpush.msra.mxu0 %v256
      %276 = vmatmul.f32.gmra.mxu0 %v253
      %v277 = vpop.f32.mrf.mxu0
      %v278 = vadd.f32 0.0, %v277
      %279 = vdwg.mxu0
      %280 = vmatpush.msra.mxu0 0.0
      %281 = vmatpush.msra.mxu0 0.0
      %282 = vmatpush.msra.mxu0 0.0
      %283 = vmatpush.msra.mxu0 0.0
      %284 = vmatpush.msra.mxu0 0.0
      %285 = vmatpush.msra.mxu0 0.0
      %286 = vmatpush.msra.mxu0 0.0
      %287 = vmatpush.msra.mxu0 0.0
      %288 = vmatpush.msra.mxu0 0.0
      %289 = vmatpush.msra.mxu0 0.0
      %290 = vmatpush.msra.mxu0 0.0
      %291 = vmatpush.msra.mxu0 0.0
      %292 = vmatpush.msra.mxu0 0.0
      %293 = vmatpush.msra.mxu0 0.0
      %294 = vmatpush.msra.mxu0 0.0
      %295 = vmatpush.msra.mxu0 %v258
      %296 = vmatmul.f32.gmra.mxu0 %v253
      %v297 = vpop.f32.mrf.mxu0
      %v298 = vadd.f32 0.0, %v297
      %299 = vdwg.mxu0
      %v301 = vsel %vm251, %v229, 0
      %v304 = vsel %vm255, %v227, 0
      %v307 = vsel %vm255, %v228, 0
      %309 = vmatpush.msra.mxu0 0.0
      %310 = vmatpush.msra.mxu0 0.0
      %311 = vmatpush.msra.mxu0 0.0
      %312 = vmatpush.msra.mxu0 0.0
      %313 = vmatpush.msra.mxu0 0.0
      %314 = vmatpush.msra.mxu0 0.0
      %315 = vmatpush.msra.mxu0 0.0
      %316 = vmatpush.msra.mxu0 0.0
      %317 = vmatpush.msra.mxu0 0.0
      %318 = vmatpush.msra.mxu0 0.0
      %319 = vmatpush.msra.mxu0 0.0
      %320 = vmatpush.msra.mxu0 0.0
      %321 = vmatpush.msra.mxu0 0.0
      %322 = vmatpush.msra.mxu0 0.0
      %323 = vmatpush.msra.mxu0 0.0
      %324 = vmatpush.msra.mxu0 %v304
      %325 = vmatmul.f32.gmra.mxu0 %v301
      %v326 = vpop.f32.mrf.mxu0
      %v327 = vadd.f32 %v278, %v326
      %328 = vdwg.mxu0
      %329 = vmatpush.msra.mxu0 0.0
      %330 = vmatpush.msra.mxu0 0.0
      %331 = vmatpush.msra.mxu0 0.0
      %332 = vmatpush.msra.mxu0 0.0
      %333 = vmatpush.msra.mxu0 0.0
      %334 = vmatpush.msra.mxu0 0.0
      %335 = vmatpush.msra.mxu0 0.0
      %336 = vmatpush.msra.mxu0 0.0
      %337 = vmatpush.msra.mxu0 0.0
      %338 = vmatpush.msra.mxu0 0.0
      %339 = vmatpush.msra.mxu0 0.0
      %340 = vmatpush.msra.mxu0 0.0
      %341 = vmatpush.msra.mxu0 0.0
      %342 = vmatpush.msra.mxu0 0.0
      %343 = vmatpush.msra.mxu0 0.0
      %344 = vmatpush.msra.mxu0 %v307
      %345 = vmatmul.f32.gmra.mxu0 %v301
      %v346 = vpop.f32.mrf.mxu0
      %v347 = vadd.f32 %v298, %v346
      %348 = vdwg.mxu0
      %v349 = vld [vmem:[#allocation2] sm:$0xff]
      %v350 = vld [vmem:[#allocation2 + $0x8] sm:$0xf]
      %353 = vst [vmem:[#allocation1] ss:$2 sm:$0xff] %v349
      %s354 = scalar_lea.vmem [#allocation1], 16
      %355 = vst [vmem:[%s354] ss:$2 sm:$0xff] %v350
      %v356 = vld.sshfl [vmem:[#allocation1] sm:$0xff pattern:$0x75316420]
      %v357 = vld.sshfl [vmem:[#allocation1 + $0x8] sm:$0xff pattern:$0x75316420]
      %v358 = vld.sshfl [vmem:[#allocation1 + $0x10] sm:$0xff pattern:$0x75316420]
      %359 = vrot.lane.b32.xlu0 %v356, 15
      %v360 = vpop.permute.xlu0 %359
      %361 = vrot.lane.b32.xlu0 %v357, 15
      %v362 = vpop.permute.xlu0 %361
      %363 = vrot.lane.b32.xlu0 %v358, 15
      %v364 = vpop.permute.xlu0 %363
      %vm365 = vcmask 121856
      %v366 = vsel %vm365, %v360, %v362
      %v367 = vsel %vm365, %v362, %v364
      %v370 = vsel %vm204, %v366, 0.0
      %v371 = vsel %vm205, %v367, 0.0
      %s372 = scalar_lea.vmem %s1, 16
      %v373 = vld [vmem:[%s372] sm:$0xff]
      %v375 = vsel %vm251, %v373, 0
      %v378 = vsel %vm255, %v370, 0
      %v381 = vsel %vm255, %v371, 0
      %383 = vmatpush.msra.mxu0 0.0
      %384 = vmatpush.msra.mxu0 0.0
      %385 = vmatpush.msra.mxu0 0.0
      %386 = vmatpush.msra.mxu0 0.0
      %387 = vmatpush.msra.mxu0 0.0
      %388 = vmatpush.msra.mxu0 0.0
      %389 = vmatpush.msra.mxu0 0.0
      %390 = vmatpush.msra.mxu0 0.0
      %391 = vmatpush.msra.mxu0 0.0
      %392 = vmatpush.msra.mxu0 0.0
      %393 = vmatpush.msra.mxu0 0.0
      %394 = vmatpush.msra.mxu0 0.0
      %395 = vmatpush.msra.mxu0 0.0
      %396 = vmatpush.msra.mxu0 0.0
      %397 = vmatpush.msra.mxu0 0.0
      %398 = vmatpush.msra.mxu0 %v378
      %399 = vmatmul.f32.gmra.mxu0 %v375
      %v400 = vpop.f32.mrf.mxu0
      %v401 = vadd.f32 0.0, %v400
      %402 = vdwg.mxu0
      %403 = vmatpush.msra.mxu0 0.0
      %404 = vmatpush.msra.mxu0 0.0
      %405 = vmatpush.msra.mxu0 0.0
      %406 = vmatpush.msra.mxu0 0.0
      %407 = vmatpush.msra.mxu0 0.0
      %408 = vmatpush.msra.mxu0 0.0
      %409 = vmatpush.msra.mxu0 0.0
      %410 = vmatpush.msra.mxu0 0.0
      %411 = vmatpush.msra.mxu0 0.0
      %412 = vmatpush.msra.mxu0 0.0
      %413 = vmatpush.msra.mxu0 0.0
      %414 = vmatpush.msra.mxu0 0.0
      %415 = vmatpush.msra.mxu0 0.0
      %416 = vmatpush.msra.mxu0 0.0
      %417 = vmatpush.msra.mxu0 0.0
      %418 = vmatpush.msra.mxu0 %v381
      %419 = vmatmul.f32.gmra.mxu0 %v375
      %v420 = vpop.f32.mrf.mxu0
      %v421 = vadd.f32 0.0, %v420
      %422 = vdwg.mxu0
      %v423 = vadd.f32 %v327, %v401
      %v424 = vadd.f32 %v347, %v421
      %v425 = vld [vmem:[#allocation2] sm:$0xff]
      %v426 = vld [vmem:[#allocation2 + $0x8] sm:$0xf]
      %429 = vst [vmem:[#allocation1] ss:$2 sm:$0xff] %v425
      %s430 = scalar_lea.vmem [#allocation1], 16
      %431 = vst [vmem:[%s430] ss:$2 sm:$0xff] %v426
      %v432 = vld.sshfl [vmem:[#allocation1] sm:$0xff pattern:$0x75316420]
      %v433 = vld.sshfl [vmem:[#allocation1 + $0x8] sm:$0xff pattern:$0x75316420]
      %v434 = vld.sshfl [vmem:[#allocation1 + $0x10] sm:$0xff pattern:$0x75316420]
      %435 = vrot.lane.b32.xlu0 %v432, 1
      %v436 = vpop.permute.xlu0 %435
      %437 = vrot.lane.b32.xlu0 %v433, 1
      %v438 = vpop.permute.xlu0 %437
      %439 = vrot.lane.b32.xlu0 %v434, 1
      %v440 = vpop.permute.xlu0 %439
      %vm441 = vcmask 7168
      %v442 = vsel %vm441, %v436, %v438
      %v443 = vsel %vm441, %v438, %v440
      %v446 = vsel %vm202, %v442, 0.0
      %v447 = vsel %vm203, %v443, 0.0
      %s448 = scalar_lea.vmem %s1, 24
      %v449 = vld [vmem:[%s448] sm:$0xff]
      %v451 = vsel %vm251, %v449, 0
      %v454 = vsel %vm255, %v446, 0
      %v457 = vsel %vm255, %v447, 0
      %459 = vmatpush.msra.mxu0 0.0
      %460 = vmatpush.msra.mxu0 0.0
      %461 = vmatpush.msra.mxu0 0.0
      %462 = vmatpush.msra.mxu0 0.0
      %463 = vmatpush.msra.mxu0 0.0
      %464 = vmatpush.msra.mxu0 0.0
      %465 = vmatpush.msra.mxu0 0.0
      %466 = vmatpush.msra.mxu0 0.0
      %467 = vmatpush.msra.mxu0 0.0
      %468 = vmatpush.msra.mxu0 0.0
      %469 = vmatpush.msra.mxu0 0.0
      %470 = vmatpush.msra.mxu0 0.0
      %471 = vmatpush.msra.mxu0 0.0
      %472 = vmatpush.msra.mxu0 0.0
      %473 = vmatpush.msra.mxu0 0.0
      %474 = vmatpush.msra.mxu0 %v454
      %475 = vmatmul.f32.gmra.mxu0 %v451
      %v476 = vpop.f32.mrf.mxu0
      %v477 = vadd.f32 0.0, %v476
      %478 = vdwg.mxu0
      %479 = vmatpush.msra.mxu0 0.0
      %480 = vmatpush.msra.mxu0 0.0
      %481 = vmatpush.msra.mxu0 0.0
      %482 = vmatpush.msra.mxu0 0.0
      %483 = vmatpush.msra.mxu0 0.0
      %484 = vmatpush.msra.mxu0 0.0
      %485 = vmatpush.msra.mxu0 0.0
      %486 = vmatpush.msra.mxu0 0.0
      %487 = vmatpush.msra.mxu0 0.0
      %488 = vmatpush.msra.mxu0 0.0
      %489 = vmatpush.msra.mxu0 0.0
      %490 = vmatpush.msra.mxu0 0.0
      %491 = vmatpush.msra.mxu0 0.0
      %492 = vmatpush.msra.mxu0 0.0
      %493 = vmatpush.msra.mxu0 0.0
      %494 = vmatpush.msra.mxu0 %v457
      %495 = vmatmul.f32.gmra.mxu0 %v451
      %v496 = vpop.f32.mrf.mxu0
      %v497 = vadd.f32 0.0, %v496
      %498 = vdwg.mxu0
      %v499 = vadd.f32 %v423, %v477
      %v500 = vadd.f32 %v424, %v497
      %v501 = vld [vmem:[#allocation2 + $0x4] sm:$0xff]
      %s502 = scalar_lea.vmem %s1, 32
      %v503 = vld [vmem:[%s502] sm:$0xff]
      %505 = vst [vmem:[#allocation1] ss:$2 sm:$0xff] %v501
      %v506 = vld.sshfl [vmem:[#allocation1] sm:$0xff pattern:$0x75316420]
      %v507 = vld.sshfl [vmem:[#allocation1 + $0x8] sm:$0xff pattern:$0x75316420]
      %v509 = vsel %vm251, %v503, 0
      %v511 = vsel %vm255, %v506, 0
      %v513 = vsel %vm255, %v507, 0
      %515 = vmatpush.msra.mxu0 0.0
      %516 = vmatpush.msra.mxu0 0.0
      %517 = vmatpush.msra.mxu0 0.0
      %518 = vmatpush.msra.mxu0 0.0
      %519 = vmatpush.msra.mxu0 0.0
      %520 = vmatpush.msra.mxu0 0.0
      %521 = vmatpush.msra.mxu0 0.0
      %522 = vmatpush.msra.mxu0 0.0
      %523 = vmatpush.msra.mxu0 0.0
      %524 = vmatpush.msra.mxu0 0.0
      %525 = vmatpush.msra.mxu0 0.0
      %526 = vmatpush.msra.mxu0 0.0
      %527 = vmatpush.msra.mxu0 0.0
      %528 = vmatpush.msra.mxu0 0.0
      %529 = vmatpush.msra.mxu0 0.0
      %530 = vmatpush.msra.mxu0 %v511
      %531 = vmatmul.f32.gmra.mxu0 %v509
      %v532 = vpop.f32.mrf.mxu0
      %v533 = vadd.f32 0.0, %v532
      %534 = vdwg.mxu0
      %535 = vmatpush.msra.mxu0 0.0
      %536 = vmatpush.msra.mxu0 0.0
      %537 = vmatpush.msra.mxu0 0.0
      %538 = vmatpush.msra.mxu0 0.0
      %539 = vmatpush.msra.mxu0 0.0
      %540 = vmatpush.msra.mxu0 0.0
      %541 = vmatpush.msra.mxu0 0.0
      %542 = vmatpush.msra.mxu0 0.0
      %543 = vmatpush.msra.mxu0 0.0
      %544 = vmatpush.msra.mxu0 0.0
      %545 = vmatpush.msra.mxu0 0.0
      %546 = vmatpush.msra.mxu0 0.0
      %547 = vmatpush.msra.mxu0 0.0
      %548 = vmatpush.msra.mxu0 0.0
      %549 = vmatpush.msra.mxu0 0.0
      %550 = vmatpush.msra.mxu0 %v513
      %551 = vmatmul.f32.gmra.mxu0 %v509
      %v552 = vpop.f32.mrf.mxu0
      %v553 = vadd.f32 0.0, %v552
      %554 = vdwg.mxu0
      %v555 = vadd.f32 %v499, %v533
      %v556 = vadd.f32 %v500, %v553
      %v557 = vld [vmem:[#allocation2 + $0x4] sm:$0xff]
      %v558 = vld [vmem:[#allocation2 + $0xc] sm:$0xf]
      %561 = vst [vmem:[#allocation1] ss:$2 sm:$0xff] %v557
      %s562 = scalar_lea.vmem [#allocation1], 16
      %563 = vst [vmem:[%s562] ss:$2 sm:$0xff] %v558
      %v564 = vld.sshfl [vmem:[#allocation1] sm:$0xff pattern:$0x75316420]
      %v565 = vld.sshfl [vmem:[#allocation1 + $0x8] sm:$0xff pattern:$0x75316420]
      %v566 = vld.sshfl [vmem:[#allocation1 + $0x10] sm:$0xff pattern:$0x75316420]
      %567 = vrot.lane.b32.xlu0 %v564, 127
      %v568 = vpop.permute.xlu0 %567
      %569 = vrot.lane.b32.xlu0 %v565, 127
      %v570 = vpop.permute.xlu0 %569
      %571 = vrot.lane.b32.xlu0 %v566, 127
      %v572 = vpop.permute.xlu0 %571
      %vm573 = vcmask 1039360
      %v574 = vsel %vm573, %v568, %v570
      %v575 = vsel %vm573, %v570, %v572
      %v578 = vsel %vm204, %v574, 0.0
      %v579 = vsel %vm205, %v575, 0.0
      %s580 = scalar_lea.vmem %s1, 40
      %v581 = vld [vmem:[%s580] sm:$0xff]
      %v583 = vsel %vm251, %v581, 0
      %v586 = vsel %vm255, %v578, 0
      %v589 = vsel %vm255, %v579, 0
      %591 = vmatpush.msra.mxu0 0.0
      %592 = vmatpush.msra.mxu0 0.0
      %593 = vmatpush.msra.mxu0 0.0
      %594 = vmatpush.msra.mxu0 0.0
      %595 = vmatpush.msra.mxu0 0.0
      %596 = vmatpush.msra.mxu0 0.0
      %597 = vmatpush.msra.mxu0 0.0
      %598 = vmatpush.msra.mxu0 0.0
      %599 = vmatpush.msra.mxu0 0.0
      %600 = vmatpush.msra.mxu0 0.0
      %601 = vmatpush.msra.mxu0 0.0
      %602 = vmatpush.msra.mxu0 0.0
      %603 = vmatpush.msra.mxu0 0.0
      %604 = vmatpush.msra.mxu0 0.0
      %605 = vmatpush.msra.mxu0 0.0
      %606 = vmatpush.msra.mxu0 %v586
      %607 = vmatmul.f32.gmra.mxu0 %v583
      %v608 = vpop.f32.mrf.mxu0
      %v609 = vadd.f32 0.0, %v608
      %610 = vdwg.mxu0
      %611 = vmatpush.msra.mxu0 0.0
      %612 = vmatpush.msra.mxu0 0.0
      %613 = vmatpush.msra.mxu0 0.0
      %614 = vmatpush.msra.mxu0 0.0
      %615 = vmatpush.msra.mxu0 0.0
      %616 = vmatpush.msra.mxu0 0.0
      %617 = vmatpush.msra.mxu0 0.0
      %618 = vmatpush.msra.mxu0 0.0
      %619 = vmatpush.msra.mxu0 0.0
      %620 = vmatpush.msra.mxu0 0.0
      %621 = vmatpush.msra.mxu0 0.0
      %622 = vmatpush.msra.mxu0 0.0
      %623 = vmatpush.msra.mxu0 0.0
      %624 = vmatpush.msra.mxu0 0.0
      %625 = vmatpush.msra.mxu0 0.0
      %626 = vmatpush.msra.mxu0 %v589
      %627 = vmatmul.f32.gmra.mxu0 %v583
      %v628 = vpop.f32.mrf.mxu0
      %v629 = vadd.f32 0.0, %v628
      %630 = vdwg.mxu0
      %v631 = vadd.f32 %v555, %v609
      %v632 = vadd.f32 %v556, %v629
      %v633 = vld [vmem:[#allocation2 + $0x4] sm:$0xff]
      %v634 = vld [vmem:[#allocation2 + $0xc] sm:$0xf]
      %637 = vst [vmem:[#allocation1] ss:$2 sm:$0xff] %v633
      %s638 = scalar_lea.vmem [#allocation1], 16
      %639 = vst [vmem:[%s638] ss:$2 sm:$0xff] %v634
      %v640 = vld.sshfl [vmem:[#allocation1] sm:$0xff pattern:$0x75316420]
      %v641 = vld.sshfl [vmem:[#allocation1 + $0x8] sm:$0xff pattern:$0x75316420]
      %v642 = vld.sshfl [vmem:[#allocation1 + $0x10] sm:$0xff pattern:$0x75316420]
      %643 = vrot.lane.b32.xlu0 %v640, 113
      %v644 = vpop.permute.xlu0 %643
      %645 = vrot.lane.b32.xlu0 %v641, 113
      %v646 = vpop.permute.xlu0 %645
      %647 = vrot.lane.b32.xlu0 %v642, 113
      %v648 = vpop.permute.xlu0 %647
      %vm649 = vcmask 924672
      %v650 = vsel %vm649, %v644, %v646
      %v651 = vsel %vm649, %v646, %v648
      %v654 = vsel %vm202, %v650, 0.0
      %v655 = vsel %vm203, %v651, 0.0
      %s656 = scalar_lea.vmem %s1, 48
      %v657 = vld [vmem:[%s656] sm:$0xff]
      %v659 = vsel %vm251, %v657, 0
      %v662 = vsel %vm255, %v654, 0
      %v665 = vsel %vm255, %v655, 0
      %667 = vmatpush.msra.mxu0 0.0
      %668 = vmatpush.msra.mxu0 0.0
      %669 = vmatpush.msra.mxu0 0.0
      %670 = vmatpush.msra.mxu0 0.0
      %671 = vmatpush.msra.mxu0 0.0
      %672 = vmatpush.msra.mxu0 0.0
      %673 = vmatpush.msra.mxu0 0.0
      %674 = vmatpush.msra.mxu0 0.0
      %675 = vmatpush.msra.mxu0 0.0
      %676 = vmatpush.msra.mxu0 0.0
      %677 = vmatpush.msra.mxu0 0.0
      %678 = vmatpush.msra.mxu0 0.0
      %679 = vmatpush.msra.mxu0 0.0
      %680 = vmatpush.msra.mxu0 0.0
      %681 = vmatpush.msra.mxu0 0.0
      %682 = vmatpush.msra.mxu0 %v662
      %683 = vmatmul.f32.gmra.mxu0 %v659
      %v684 = vpop.f32.mrf.mxu0
      %v685 = vadd.f32 0.0, %v684
      %686 = vdwg.mxu0
      %687 = vmatpush.msra.mxu0 0.0
      %688 = vmatpush.msra.mxu0 0.0
      %689 = vmatpush.msra.mxu0 0.0
      %690 = vmatpush.msra.mxu0 0.0
      %691 = vmatpush.msra.mxu0 0.0
      %692 = vmatpush.msra.mxu0 0.0
      %693 = vmatpush.msra.mxu0 0.0
      %694 = vmatpush.msra.mxu0 0.0
      %695 = vmatpush.msra.mxu0 0.0
      %696 = vmatpush.msra.mxu0 0.0
      %697 = vmatpush.msra.mxu0 0.0
      %698 = vmatpush.msra.mxu0 0.0
      %699 = vmatpush.msra.mxu0 0.0
      %700 = vmatpush.msra.mxu0 0.0
      %701 = vmatpush.msra.mxu0 0.0
      %702 = vmatpush.msra.mxu0 %v665
      %703 = vmatmul.f32.gmra.mxu0 %v659
      %v704 = vpop.f32.mrf.mxu0
      %v705 = vadd.f32 0.0, %v704
      %706 = vdwg.mxu0
      %v707 = vadd.f32 %v631, %v685
      %v708 = vadd.f32 %v632, %v705
      %v709 = vld [vmem:[#allocation2 + $0x4] sm:$0xff]
      %v710 = vld [vmem:[#allocation2 + $0xc] sm:$0xf]
      %s711 = scalar_lea.vmem %s1, 56
      %v712 = vld [vmem:[%s711] sm:$0xff]
      %715 = vst [vmem:[#allocation1] ss:$2 sm:$0xff] %v709
      %s716 = scalar_lea.vmem [#allocation1], 16
      %717 = vst [vmem:[%s716] ss:$2 sm:$0xff] %v710
      %v718 = vld.sshfl [vmem:[#allocation1] sm:$0xff pattern:$0x75316420]
      %v719 = vld.sshfl [vmem:[#allocation1 + $0x8] sm:$0xff pattern:$0x75316420]
      %v720 = vld.sshfl [vmem:[#allocation1 + $0x10] sm:$0xff pattern:$0x75316420]
      %721 = vrot.lane.b32.xlu0 %v718, 112
      %v722 = vpop.permute.xlu0 %721
      %723 = vrot.lane.b32.xlu0 %v719, 112
      %v724 = vpop.permute.xlu0 %723
      %725 = vrot.lane.b32.xlu0 %v720, 112
      %v726 = vpop.permute.xlu0 %725
      %vm727 = vcmask 916480
      %v728 = vsel %vm727, %v722, %v724
      %v729 = vsel %vm727, %v724, %v726
      %v731 = vsel %vm251, %v712, 0
      %v733 = vsel %vm255, %v728, 0
      %v735 = vsel %vm255, %v729, 0
      %737 = vmatpush.msra.mxu0 0.0
      %738 = vmatpush.msra.mxu0 0.0
      %739 = vmatpush.msra.mxu0 0.0
      %740 = vmatpush.msra.mxu0 0.0
      %741 = vmatpush.msra.mxu0 0.0
      %742 = vmatpush.msra.mxu0 0.0
      %743 = vmatpush.msra.mxu0 0.0
      %744 = vmatpush.msra.mxu0 0.0
      %745 = vmatpush.msra.mxu0 0.0
      %746 = vmatpush.msra.mxu0 0.0
      %747 = vmatpush.msra.mxu0 0.0
      %748 = vmatpush.msra.mxu0 0.0
      %749 = vmatpush.msra.mxu0 0.0
      %750 = vmatpush.msra.mxu0 0.0
      %751 = vmatpush.msra.mxu0 0.0
      %752 = vmatpush.msra.mxu0 %v733
      %753 = vmatmul.f32.gmra.mxu0 %v731
      %v754 = vpop.f32.mrf.mxu0
      %v755 = vadd.f32 0.0, %v754
      %756 = vdwg.mxu0
      %757 = vmatpush.msra.mxu0 0.0
      %758 = vmatpush.msra.mxu0 0.0
      %759 = vmatpush.msra.mxu0 0.0
      %760 = vmatpush.msra.mxu0 0.0
      %761 = vmatpush.msra.mxu0 0.0
      %762 = vmatpush.msra.mxu0 0.0
      %763 = vmatpush.msra.mxu0 0.0
      %764 = vmatpush.msra.mxu0 0.0
      %765 = vmatpush.msra.mxu0 0.0
      %766 = vmatpush.msra.mxu0 0.0
      %767 = vmatpush.msra.mxu0 0.0
      %768 = vmatpush.msra.mxu0 0.0
      %769 = vmatpush.msra.mxu0 0.0
      %770 = vmatpush.msra.mxu0 0.0
      %771 = vmatpush.msra.mxu0 0.0
      %772 = vmatpush.msra.mxu0 %v735
      %773 = vmatmul.f32.gmra.mxu0 %v731
      %v774 = vpop.f32.mrf.mxu0
      %v775 = vadd.f32 0.0, %v774
      %776 = vdwg.mxu0
      %v777 = vadd.f32 %v707, %v755
      %v778 = vadd.f32 %v708, %v775
      %v779 = vld [vmem:[#allocation2 + $0x4] sm:$0xff]
      %v780 = vld [vmem:[#allocation2 + $0xc] sm:$0xf]
      %783 = vst [vmem:[#allocation1] ss:$2 sm:$0xff] %v779
      %s784 = scalar_lea.vmem [#allocation1], 16
      %785 = vst [vmem:[%s784] ss:$2 sm:$0xff] %v780
      %v786 = vld.sshfl [vmem:[#allocation1] sm:$0xff pattern:$0x75316420]
      %v787 = vld.sshfl [vmem:[#allocation1 + $0x8] sm:$0xff pattern:$0x75316420]
      %v788 = vld.sshfl [vmem:[#allocation1 + $0x10] sm:$0xff pattern:$0x75316420]
      %789 = vrot.lane.b32.xlu0 %v786, 111
      %v790 = vpop.permute.xlu0 %789
      %791 = vrot.lane.b32.xlu0 %v787, 111
      %v792 = vpop.permute.xlu0 %791
      %793 = vrot.lane.b32.xlu0 %v788, 111
      %v794 = vpop.permute.xlu0 %793
      %vm795 = vcmask 908288
      %v796 = vsel %vm795, %v790, %v792
      %v797 = vsel %vm795, %v792, %v794
      %v800 = vsel %vm204, %v796, 0.0
      %v801 = vsel %vm205, %v797, 0.0
      %s802 = scalar_lea.vmem %s1, 64
      %v803 = vld [vmem:[%s802] sm:$0xff]
      %v805 = vsel %vm251, %v803, 0
      %v808 = vsel %vm255, %v800, 0
      %v811 = vsel %vm255, %v801, 0
      %813 = vmatpush.msra.mxu0 0.0
      %814 = vmatpush.msra.mxu0 0.0
      %815 = vmatpush.msra.mxu0 0.0
      %816 = vmatpush.msra.mxu0 0.0
      %817 = vmatpush.msra.mxu0 0.0
      %818 = vmatpush.msra.mxu0 0.0
      %819 = vmatpush.msra.mxu0 0.0
      %820 = vmatpush.msra.mxu0 0.0
      %821 = vmatpush.msra.mxu0 0.0
      %822 = vmatpush.msra.mxu0 0.0
      %823 = vmatpush.msra.mxu0 0.0
      %824 = vmatpush.msra.mxu0 0.0
      %825 = vmatpush.msra.mxu0 0.0
      %826 = vmatpush.msra.mxu0 0.0
      %827 = vmatpush.msra.mxu0 0.0
      %828 = vmatpush.msra.mxu0 %v808
      %829 = vmatmul.f32.gmra.mxu0 %v805
      %v830 = vpop.f32.mrf.mxu0
      %v831 = vadd.f32 0.0, %v830
      %832 = vdwg.mxu0
      %833 = vmatpush.msra.mxu0 0.0
      %834 = vmatpush.msra.mxu0 0.0
      %835 = vmatpush.msra.mxu0 0.0
      %836 = vmatpush.msra.mxu0 0.0
      %837 = vmatpush.msra.mxu0 0.0
      %838 = vmatpush.msra.mxu0 0.0
      %839 = vmatpush.msra.mxu0 0.0
      %840 = vmatpush.msra.mxu0 0.0
      %841 = vmatpush.msra.mxu0 0.0
      %842 = vmatpush.msra.mxu0 0.0
      %843 = vmatpush.msra.mxu0 0.0
      %844 = vmatpush.msra.mxu0 0.0
      %845 = vmatpush.msra.mxu0 0.0
      %846 = vmatpush.msra.mxu0 0.0
      %847 = vmatpush.msra.mxu0 0.0
      %848 = vmatpush.msra.mxu0 %v811
      %849 = vmatmul.f32.gmra.mxu0 %v805
      %v850 = vpop.f32.mrf.mxu0
      %v851 = vadd.f32 0.0, %v850
      %852 = vdwg.mxu0
      %v853 = vadd.f32 %v777, %v831
      %v854 = vadd.f32 %v778, %v851
      %v855 = vld [vmem:[%s2] sm:$0xff]
      %857 = vset.pattern.permute.xlu0 0
      %858 = vperm.xlu0 %857, %v855
      %v859 = vpop.permute.xlu0 %858
      %v861 = vadd.f32 %v853, %v859
      %v862 = vadd.f32 %v854, %v859
      %v863 = vmax.f32 %v861, 0.0
      %v864 = vmax.f32 %v862, 0.0
      %865 = vst [vmem:[%s170] sm:$0xff] %v863
      %866 = vst [vmem:[%s170 + $0x8] sm:$0xff] %v864
      %p867 = scmp.lt.s32.totalorder %s14, 1
      %s868 = scalar_select %p867, %s14, 1
      %s869 = smul.addr %s868, 2
      %s870 = smul.addr %s869, 8
      %s871 = scalar_lea.vmem %s3, %s870
      // Predicated region
      $region33: #{upsample_block_forward.1} parent=31 // pred_check
        %p872 = pneg %p100
      $region34: #{upsample_block_forward.1} parent=31 // pred_check_branch
        %874 = sbr.rel (%p872) target = $region36
      $region35: #{upsample_block_forward.1} parent=31 // pred_region
        _
      $region36: #{upsample_block_forward.1} parent=31 // pred_fallthru
        _
    $region32: #{upsample_block_forward.1} parent=5 // pred_fallthru
      _
    %p875 = scmp.le.s32.totalorder 2, %s9
    // Predicated region
    $region37: #{upsample_block_forward.1} parent=5 // pred_check
      %p876 = pneg %p875
    $region38: #{upsample_block_forward.1} parent=5 // pred_check_branch
      %878 = sbr.rel (%p876) target = $region40
    $region39: #{upsample_block_forward.1} parent=5 // pred_region
      %s879 = ssub.s32 %s9, 2
      // Predicated region
      $region41: #{upsample_block_forward.1} parent=39 // pred_check
        %p880 = pneg %p106
      $region42: #{upsample_block_forward.1} parent=39 // pred_check_branch
        %882 = sbr.rel (%p880) target = $region44
      $region43: #{upsample_block_forward.1} parent=39 // pred_region
        %p883 = scmp.lt.s32.totalorder %s15, 1
        %s884 = scalar_select %p883, %s15, 1
        %s885 = smul.addr %s884, 2
        %s886 = smul.addr %s885, 8
        %s887 = scalar_lea.vmem %s3, %s886
      $region44: #{upsample_block_forward.1} parent=39 // pred_fallthru
        _
    $region40: #{upsample_block_forward.1} parent=5 // pred_fallthru
      _
  $region6: #{upsample_block_forward.1} parent=0 // loop_footer
    %s13 = sadd.s32 1, %s9
  $region7: #{upsample_block_forward.1} parent=0 // loop_footer_branch
    %8 = sbr.rel target = $region3
  $region8: #{upsample_block_forward.1} parent=0 // loop_exit
    _

</llo_original>
